<compile_context>
chip_gen: v7x
topology: tpu7x:2x2x1
jax: 0.10.0
libtpu: 0.0.40
codegen_flags: <defaults>
</compile_context>

<pallas_src>
import jax
import jax.numpy as jnp
from jax.experimental import pallas as pl
from jax.experimental.pallas import tpu as pltpu


# --------------------------------- kernels -----------------------------------------

def _se_fused_kernel(x_ref, w1_ref, w2_ref, o_ref):
    # x_ref / o_ref : (bb, Nf, Cf)   w1_ref: (Cf, H)   w2_ref: (H, Cf)
    # Squeeze: f32 channel *sum* over tokens; the 1/N mean divisor (and the lane-fold
    # duplication) is pre-absorbed into w1, so zero-padded token rows are exact/free.
    # (v5e note: if a bundle dump ever shows the VALU slot binding for bf16 inputs,
    #  this reduce can move to the MXU as ones(1, Nf) @ x; not needed on v6e/v7x.)
    s = jnp.sum(x_ref[...], axis=1, dtype=jnp.float32)                   # (bb, Cf)

    # Excite: Linear -> ReLU -> Linear -> Sigmoid (tiny MXU matmuls, f32 accumulate;
    # weights already f32 and in A @ W layout -> no in-kernel cast/transpose).
    h = jnp.maximum(jnp.dot(s, w1_ref[...],
                            preferred_element_type=jnp.float32), 0.0)    # (bb, H)
    y = jax.nn.sigmoid(jnp.dot(h, w2_ref[...],
                               preferred_element_type=jnp.float32))      # (bb, Cf)

    # Scale: broadcast over the token axis, in the native dtype (no f32 block copy).
    o_ref[...] = x_ref[...] * y.astype(o_ref.dtype)[:, None, :]


def _se_squeeze_kernel(x_ref, w1_ref, w2_ref, y_ref, acc_ref):
    # Two-pass fallback, pass 1: accumulate the f32 channel sum over N-tiles
    # (accumulator resident across the inner "arbitrary" axis), then the tiny MLP.
    t = pl.program_id(1)

    @pl.when(t == 0)
    def _():
        acc_ref[...] = jnp.zeros_like(acc_ref)

    acc_ref[...] += jnp.sum(x_ref[...], axis=1, dtype=jnp.float32)       # (1, Cf)

    @pl.when(t == pl.num_programs(1) - 1)
    def _():
        h = jnp.maximum(jnp.dot(acc_ref[...], w1_ref[...],
                                preferred_element_type=jnp.float32), 0.0)
        y = jax.nn.sigmoid(jnp.dot(h, w2_ref[...],
                                   preferred_element_type=jnp.float32))   # (1, Cf)
        y_ref[...] = y[:, None, :]                                        # (1, 1, Cf)


def _se_scale_kernel(x_ref, y_ref, o_ref):
    # Two-pass fallback, pass 2: streaming per-element scale.
    # x (1, tn, Cf) * y (1, 1, Cf) broadcasts over the token tile.
    o_ref[...] = x_ref[...] * y_ref[...].astype(o_ref.dtype)


# --------------------------------- wrapper ------------------------------------------

def _vmem_budget_bytes():
    """(block budget, compiler vmem limit) per TPU generation.

    v7x has only 64 MiB VMEM per TensorCore -> smaller blocks / limit (<=75%, with
    headroom for double-buffered weights and compiler scratch); v5e/v6e have 128 MiB
    -> larger blocks amortize the ~0.35 us per-grid-step overhead.
    """
    try:
        cap = int(pltpu.get_tpu_info().vmem_capacity_bytes)
    except Exception:
        return 32 * 1024 * 1024, 48 * 1024 * 1024     # conservative: safe on every gen
    if cap <= 64 * 1024 * 1024:                       # v7x-class part
        return 24 * 1024 * 1024, 44 * 1024 * 1024
    return 48 * 1024 * 1024, 96 * 1024 * 1024         # v5e / v6e (128 MiB)


def prepare_se_weights(w1, w2, n_tokens, fold):
    """Fold the fc weights once for the kernels (cache/hoist for repeated calls).

    Tiles across the lane-fold factor, absorbs the 1/N mean divisor into w1 (so the
    kernel only needs a raw channel sum and zero-padded token rows are exact),
    transposes to "A @ W" layout and casts to f32.
    """
    if fold > 1:
        w1 = jnp.tile(w1, (1, fold))   # (H, Cf): column j*C+c duplicates w1[:, c]
        w2 = jnp.tile(w2, (fold, 1))   # (Cf, H): row    j*C+c duplicates w2[c, :]
    w1_eff = jnp.transpose(w1.astype(jnp.float32) / float(n_tokens))     # (Cf, H)
    w2_eff = jnp.transpose(w2.astype(jnp.float32))                       # (H, Cf)
    return w1_eff, w2_eff


def _pad_and_fold(x, n_pad, nf, cf):
    b, n, _ = x.shape
    if n_pad != n:
        x = jnp.pad(x, ((0, 0), (0, n_pad - n), (0, 0)))
    return x.reshape(b, nf, cf)


def se_layer(x, w1, w2, *, force_two_pass=False):
    """Squeeze-and-excitation over tokens.

    x:  (B, N, C) activations (f32 or bf16; bf16 halves HBM traffic on this
        memory-bound kernel -- the squeeze still accumulates in f32)
    w1: (H, C)   fc[0].weight of nn.Linear(C, C//r, bias=False)
    w2: (C, H)   fc[2].weight of nn.Linear(C//r, C, bias=False)
    """
    B, N, C = x.shape
    H = w1.shape[0]
    itemsize = x.dtype.itemsize
    budget, vmem_limit = _vmem_budget_bytes()

    # Lane folding: make the minor (lane) axis 128-dense whenever possible.
    g = 128 // C if (C < 128 and 128 % C == 0) else 1
    Cf = C * g
    nf_min = pl.cdiv(N, g)
    per_row_bytes = Cf * itemsize

    w1_eff, w2_eff = prepare_se_weights(w1, w2, N, g)

    # Single-pass iff a double-buffered in+out slab for one batch fits the budget.
    # TODO(synk): on v7x, also route tiny B (< 2 per TensorCore) to the two-pass
    # N-tiled path so both cores have work even with a batch-only grid.
    single_pass = (not force_two_pass) and (4 * nf_min * per_row_bytes <= budget)

    if single_pass:
        Nf = nf_min
        n_pad = Nf * g
        x_f = _pad_and_fold(x, n_pad, Nf, Cf)
        per_batch_bytes = Nf * per_row_bytes

        # Batch blocking: largest divisor of B whose double-buffered in+out blocks fit.
        # Prefer an even grid count >= 4 (>= 2 pipelined steps per v7x TensorCore) as
        # long as blocks stay >= 1 MiB; otherwise take the largest block (fewer fixed
        # per-step overheads at small shapes).
        fits = [d for d in range(1, B + 1)
                if B % d == 0 and 4 * d * per_batch_bytes <= budget]
        good = [d for d in fits
                if (B // d) >= 4 and (B // d) % 2 == 0
                and d * per_batch_bytes >= (1 << 20)]
        bb = max(good) if good else max(fits)

        out_f = pl.pallas_call(
            _se_fused_kernel,
            out_shape=jax.ShapeDtypeStruct((B, Nf, Cf), x.dtype),
            grid_spec=pltpu.PrefetchScalarGridSpec(
                num_scalar_prefetch=0,
                grid=(B // bb,),
                in_specs=[
                    pl.BlockSpec((bb, Nf, Cf), lambda i: (i, 0, 0)),
                    pl.BlockSpec((Cf, H), lambda i: (0, 0)),   # constant block -> resident
                    pl.BlockSpec((H, Cf), lambda i: (0, 0)),
                ],
                out_specs=pl.BlockSpec((bb, Nf, Cf), lambda i: (i, 0, 0)),
            ),
            compiler_params=pltpu.CompilerParams(
                dimension_semantics=("parallel",),
                vmem_limit_bytes=vmem_limit,
            ),
        )(x_f, w1_eff, w2_eff)
    else:
        # Two-pass fallback: a single batch's (Nf, Cf) slab doesn't fit VMEM (hit ~2x
        # sooner on v7x's 64 MiB per-core VMEM).  Costs ~1.5x HBM traffic, never OOMs.
        tn = max(8, (budget // (4 * per_row_bytes)) // 8 * 8)   # token tile (mult. of 8)
        tn = min(tn, pl.cdiv(nf_min, 8) * 8)
        Nf = pl.cdiv(nf_min, tn) * tn                           # pad folded rows to tn
        n_pad = Nf * g
        nt = Nf // tn
        x_f = _pad_and_fold(x, n_pad, Nf, Cf)

        # Pass 1: squeeze (N-tiled f32 sum, resident accumulator) + excite MLP.
        y = pl.pallas_call(
            _se_squeeze_kernel,
            out_shape=jax.ShapeDtypeStruct((B, 1, Cf), jnp.float32),
            grid_spec=pltpu.PrefetchScalarGridSpec(
                num_scalar_prefetch=0,
                grid=(B, nt),
                in_specs=[
                    pl.BlockSpec((1, tn, Cf), lambda b, t: (b, t, 0)),
                    pl.BlockSpec((Cf, H), lambda b, t: (0, 0)),
                    pl.BlockSpec((H, Cf), lambda b, t: (0, 0)),
                ],
                out_specs=pl.BlockSpec((1, 1, Cf), lambda b, t: (b, 0, 0)),
                scratch_shapes=[pltpu.VMEM((1, Cf), jnp.float32)],
            ),
            compiler_params=pltpu.CompilerParams(
                dimension_semantics=("parallel", "arbitrary"),
                vmem_limit_bytes=vmem_limit,
            ),
        )(x_f, w1_eff, w2_eff)

        # Pass 2: streaming scale (both axes parallel, y block resident per batch).
        out_f = pl.pallas_call(
            _se_scale_kernel,
            out_shape=jax.ShapeDtypeStruct((B, Nf, Cf), x.dtype),
            grid_spec=pltpu.PrefetchScalarGridSpec(
                num_scalar_prefetch=0,
                grid=(B, nt),
                in_specs=[
                    pl.BlockSpec((1, tn, Cf), lambda b, t: (b, t, 0)),
                    pl.BlockSpec((1, 1, Cf), lambda b, t: (b, 0, 0)),
                ],
                out_specs=pl.BlockSpec((1, tn, Cf), lambda b, t: (b, t, 0)),
            ),
            compiler_params=pltpu.CompilerParams(
                dimension_semantics=("parallel", "parallel"),
                vmem_limit_bytes=vmem_limit,
            ),
        )(x_f, y)

    out = out_f.reshape(B, n_pad, C)
    return out[:, :N, :] if n_pad != N else out


# --------------------------------- reference / tests ---------------------------------

def se_layer_ref(x, w1, w2):
    """Pure-JAX reference mirroring the PyTorch module."""
    xt = jnp.transpose(x, (0, 2, 1))                 # (B, C, N)
    y = jnp.mean(xt, axis=-1)                        # (B, C)
    y = jnp.maximum(y @ w1.T, 0.0)                   # (B, H)
    y = jax.nn.sigmoid(y @ w2.T)                     # (B, C)
    out = xt * y[:, :, None]                         # (B, C, N)
    return jnp.transpose(out, (0, 2, 1))             # (B, N, C)


def _make_case(key, B, N, C, reduction):
    H = max(1, C // reduction)
    kx, k1, k2 = jax.random.split(key, 3)
    x = jax.random.normal(kx, (B, N, C), dtype=jnp.float32)
    bound1 = 1.0 / (C ** 0.5)
    bound2 = 1.0 / (H ** 0.5)
    w1 = jax.random.uniform(k1, (H, C), jnp.float32, minval=-bound1, maxval=bound1)
    w2 = jax.random.uniform(k2, (C, H), jnp.float32, minval=-bound2, maxval=bound2)
    return x, w1, w2


if __name__ == "__main__":
    key = jax.random.PRNGKey(0)
    ks = jax.random.split(key, 4)

    # 1) SELayer(channel=32, reduction=16), (B=2, N=8, C=32): lane-folded to (2,2,128).
    x, w1, w2 = _make_case(ks[0], B=2, N=8, C=32, reduction=16)
    out = jax.block_until_ready(se_layer(x, w1, w2))
    assert out.shape == x.shape
    assert jnp.allclose(out, se_layer_ref(x, w1, w2), atol=1e-5, rtol=1e-5), "case1"

    # 2) N=6 not divisible by the fold factor: now lane-folded via zero-row padding
    #    (previously the masked-store g=1 fallback).
    x, w1, w2 = _make_case(ks[1], B=2, N=6, C=32, reduction=8)
    out = jax.block_until_ready(se_layer(x, w1, w2))
    assert out.shape == x.shape
    assert jnp.allclose(out, se_layer_ref(x, w1, w2), atol=1e-5, rtol=1e-5), "case2"

    # 3) C >= 128 (no folding), odd batch.
    x, w1, w2 = _make_case(ks[2], B=3, N=16, C=256, reduction=16)
    out = jax.block_until_ready(se_layer(x, w1, w2))
    assert out.shape == x.shape
    assert jnp.allclose(out, se_layer_ref(x, w1, w2), atol=1e-5, rtol=1e-5), "case3"

    # 4) Two-pass fallback path (forced at small shapes for compile/correctness coverage).
    x, w1, w2 = _make_case(ks[3], B=2, N=8, C=32, reduction=16)
    out = jax.block_until_ready(se_layer(x, w1, w2, force_two_pass=True))
    assert out.shape == x.shape
    assert jnp.allclose(out, se_layer_ref(x, w1, w2), atol=1e-5, rtol=1e-5), "case4"

    # 5) bf16 activations (mem-bound kernel: halving the bytes is the remaining lever).
    xb = x.astype(jnp.bfloat16)
    outb = jax.block_until_ready(se_layer(xb, w1, w2))
    refb = se_layer_ref(xb.astype(jnp.float32), w1, w2)
    assert outb.dtype == jnp.bfloat16 and outb.shape == x.shape
    assert jnp.allclose(outb.astype(jnp.float32), refb, atol=5e-2, rtol=5e-2), "case5"

    print("KERNEL_OK")
</pallas_src>

<mosaic_0001>
module attributes {stable_mosaic.version = 11 : i64} {
  func.func @_se_fused_kernel(%arg0: i32, %arg1: memref<2x2x128xf32, #tpu.memory_space<vmem>>, %arg2: memref<128x2xf32, #tpu.memory_space<vmem>>, %arg3: memref<2x128xf32, #tpu.memory_space<vmem>>, %arg4: memref<2x2x128xf32, #tpu.memory_space<vmem>>) attributes {dimension_semantics = [#tpu.dimension_semantics<parallel>], iteration_bounds = array<i64: 1>, scalar_prefetch = 0 : i64, scratch_operands = 0 : i64, tpu.core_type = #tpu.core_type<tc>, window_params = [{transform_indices = @transform_0, window_bounds = array<i64: 2, 2, 128>}, {pipeline_mode = #tpu.pipeline_mode<synchronous>, transform_indices = @transform_1, window_bounds = array<i64: 128, 2>}, {pipeline_mode = #tpu.pipeline_mode<synchronous>, transform_indices = @transform_2, window_bounds = array<i64: 2, 128>}, {transform_indices = @transform_3, window_bounds = array<i64: 2, 2, 128>}]} {
    %c0 = arith.constant 0 : index
    %c0_0 = arith.constant 0 : index
    %c0_1 = arith.constant 0 : index
    %0 = vector.load %arg1[%c0, %c0_0, %c0_1] : memref<2x2x128xf32, #tpu.memory_space<vmem>>, vector<2x2x128xf32>
    %cst = arith.constant dense<0.000000e+00> : vector<2x128xf32>
    %1 = vector.multi_reduction <add>, %0, %cst [1] : vector<2x2x128xf32> to vector<2x128xf32>
    %c0_2 = arith.constant 0 : index
    %c0_3 = arith.constant 0 : index
    %2 = vector.load %arg2[%c0_2, %c0_3] : memref<128x2xf32, #tpu.memory_space<vmem>>, vector<128x2xf32>
    %cst_4 = arith.constant dense<0.000000e+00> : vector<2x2xf32>
    %3 = tpu.matmul %1, %2, %cst_4 {dimension_numbers = #tpu.dot_dimension_numbers<[1], [0], [0], [1], [0, 0, 1, 1], [], []>} : vector<2x128xf32>, vector<128x2xf32>, vector<2x2xf32> -> vector<2x2xf32>
    %cst_5 = arith.constant 0.000000e+00 : f32
    %4 = vector.broadcast %cst_5 : f32 to vector<2x2xf32>
    %5 = arith.maximumf %3, %4 : vector<2x2xf32>
    %c0_6 = arith.constant 0 : index
    %c0_7 = arith.constant 0 : index
    %6 = vector.load %arg3[%c0_6, %c0_7] : memref<2x128xf32, #tpu.memory_space<vmem>>, vector<2x128xf32>
    %cst_8 = arith.constant dense<0.000000e+00> : vector<2x128xf32>
    %7 = tpu.matmul %5, %6, %cst_8 {dimension_numbers = #tpu.dot_dimension_numbers<[1], [0], [0], [1], [0, 0, 1, 1], [], []>} : vector<2x2xf32>, vector<2x128xf32>, vector<2x128xf32> -> vector<2x128xf32>
    %8 = arith.negf %7 : vector<2x128xf32>
    %9 = math.exp %8 : vector<2x128xf32>
    %cst_9 = arith.constant 1.000000e+00 : f32
    %10 = vector.broadcast %cst_9 : f32 to vector<2x128xf32>
    %11 = arith.addf %10, %9 : vector<2x128xf32>
    %12 = arith.divf %10, %11 : vector<2x128xf32>
    %c0_10 = arith.constant 0 : index
    %c0_11 = arith.constant 0 : index
    %c0_12 = arith.constant 0 : index
    %13 = vector.load %arg1[%c0_10, %c0_11, %c0_12] : memref<2x2x128xf32, #tpu.memory_space<vmem>>, vector<2x2x128xf32>
    %14 = vector.shape_cast %12 : vector<2x128xf32> to vector<2x1x128xf32>
    %15 = vector.broadcast %14 : vector<2x1x128xf32> to vector<2x2x128xf32>
    %16 = arith.mulf %13, %15 : vector<2x2x128xf32>
    %c0_13 = arith.constant 0 : index
    %c0_14 = arith.constant 0 : index
    %c0_15 = arith.constant 0 : index
    %17 = vector.load %arg4[%c0_13, %c0_14, %c0_15] : memref<2x2x128xf32, #tpu.memory_space<vmem>>, vector<2x2x128xf32>
    tpu.vector_store %arg4[%c0_13, %c0_14, %c0_15], %16 {strides = array<i32>} : memref<2x2x128xf32, #tpu.memory_space<vmem>>, vector<2x2x128xf32>,
    return
  }
  func.func @transform_0(%arg0: i32) -> (i32, i32, i32) {
    %c0_i32 = arith.constant 0 : i32
    %c0_i32_0 = arith.constant 0 : i32
    %c0_i32_1 = arith.constant 0 : i32
    return %arg0, %c0_i32, %c0_i32_0 : i32, i32, i32
  }
  func.func @transform_1(%arg0: i32) -> (i32, i32) {
    %c0_i32 = arith.constant 0 : i32
    %c0_i32_0 = arith.constant 0 : i32
    %c0_i32_1 = arith.constant 0 : i32
    return %c0_i32, %c0_i32_0 : i32, i32
  }
  func.func @transform_2(%arg0: i32) -> (i32, i32) {
    %c0_i32 = arith.constant 0 : i32
    %c0_i32_0 = arith.constant 0 : i32
    %c0_i32_1 = arith.constant 0 : i32
    return %c0_i32, %c0_i32_0 : i32, i32
  }
  func.func @transform_3(%arg0: i32) -> (i32, i32, i32) {
    %c0_i32 = arith.constant 0 : i32
    %c0_i32_0 = arith.constant 0 : i32
    %c0_i32_1 = arith.constant 0 : i32
    return %arg0, %c0_i32, %c0_i32_0 : i32, i32, i32
  }
}

</mosaic_0001>

<llo_original>
// kernel: tpu_custom_call.1
$region0: #{tpu_custom_call.1}
  #allocation0 [shape = 'u32[]', space=smem, size = 0x4, offset = 0x4, fixed_abs, tag = 'smem constant byte address 0x4 - core index']
  #allocation1 [shape = 'u32[144,128]{1,0:T(1,128)}', space=vmem, size = 0x12000, scoped, tag = 'internal scratch']
  %s0 = inlined_call_operand.vmem [shape: f32[2,2,128], index: 0, kind: input, shape index: {}]
  %s1 = inlined_call_operand.vmem [shape: f32[128,2], index: 1, kind: input, shape index: {}]
  %s2 = inlined_call_operand.vmem [shape: f32[2,128], index: 2, kind: input, shape index: {}]
  %s3 = inlined_call_operand.hbm [shape: f32[2,2,128], index: 3, kind: output, shape index: {}]
  %s4 = sld [smem:[#allocation0]]
  $region22: #{tpu_custom_call.1} parent=0
    _
  %s6 = ssub.s32 1, %s4
  %s7 = scalar_select 0, %s6, %s4
  $region1: #{tpu_custom_call.1} parent=0
    #allocation2 [shape = 'u8[2048]{0}', space=vmem, size = 0x800, scoped, tag = 'output window, operand 0, single buffered']
    #allocation3 [shape = 's32[1]{0}', space=sflag, size = 0x4, scoped, tag = 'scoped memory for tpu_custom_call.1']
    %8 = vsyncpa [#allocation3], 0
    // Predicated region
    $region2: #{tpu_custom_call.1} parent=1 // pred_check
      _
    $region3: #{tpu_custom_call.1} parent=1 // pred_check_branch
      %10 = sbr.rel (0) target = $region5
    $region4: #{tpu_custom_call.1} parent=1 // pred_region
      _
    $region5: #{tpu_custom_call.1} parent=1 // pred_fallthru
      _
    // Predicated region
    $region6: #{tpu_custom_call.1} parent=1 // pred_check
      _
    $region7: #{tpu_custom_call.1} parent=1 // pred_check_branch
      %12 = sbr.rel (0) target = $region9
    $region8: #{tpu_custom_call.1} parent=1 // pred_region
      _
    $region9: #{tpu_custom_call.1} parent=1 // pred_fallthru
      _
    // Predicated region
    $region10: #{tpu_custom_call.1} parent=1 // pred_check
      _
    $region11: #{tpu_custom_call.1} parent=1 // pred_check_branch
      %14 = sbr.rel (0) target = $region13
    $region12: #{tpu_custom_call.1} parent=1 // pred_region
      _
    $region13: #{tpu_custom_call.1} parent=1 // pred_fallthru
      _
    %v15 = vld [vmem:[%s0] sm:$0x3]
    %v16 = vld [vmem:[%s0 + $0x2] sm:$0x3]
    %vm17 = vcmask 1041408
    %v18 = vsel %vm17, %v15, 0.0
    %v19 = vrot.slane %v18, 4
    %v20 = vadd.f32 %v18, %v19
    %v21 = vrot.slane %v20, 2
    %v22 = vadd.f32 %v20, %v21
    %v23 = vrot.slane %v22, 1
    %v24 = vadd.f32 %v22, %v23
    %v25 = vsel %vm17, %v16, 0.0
    %v26 = vrot.slane %v25, 4
    %v27 = vadd.f32 %v25, %v26
    %v28 = vrot.slane %v27, 2
    %v29 = vadd.f32 %v27, %v28
    %v30 = vrot.slane %v29, 1
    %v31 = vadd.f32 %v29, %v30
    %v32 = vld [vmem:[%s1] sm:$0xff]
    %v33 = vld [vmem:[%s1 + $0x8] sm:$0xff]
    %v34 = vld [vmem:[%s1 + $0x10] sm:$0xff]
    %v35 = vld [vmem:[%s1 + $0x18] sm:$0xff]
    %v36 = vld [vmem:[%s1 + $0x20] sm:$0xff]
    %v37 = vld [vmem:[%s1 + $0x28] sm:$0xff]
    %v38 = vld [vmem:[%s1 + $0x30] sm:$0xff]
    %v39 = vld [vmem:[%s1 + $0x38] sm:$0xff]
    %v40 = vld [vmem:[%s1 + $0x40] sm:$0xff]
    %v41 = vld [vmem:[%s1 + $0x48] sm:$0xff]
    %v42 = vld [vmem:[%s1 + $0x50] sm:$0xff]
    %v43 = vld [vmem:[%s1 + $0x58] sm:$0xff]
    %v44 = vld [vmem:[%s1 + $0x60] sm:$0xff]
    %v45 = vld [vmem:[%s1 + $0x68] sm:$0xff]
    %v46 = vld [vmem:[%s1 + $0x70] sm:$0xff]
    %v47 = vld [vmem:[%s1 + $0x78] sm:$0xff]
    %vm50 = vcmask 1041409
    %v51 = vsel %vm50, %v31, %v24
    %53 = vmatprep.subr.mxu0 0.0
    %54 = vmatpush1.msra.mxu0 %v32
    %55 = vmatprep.subr.mxu0 0.0
    %56 = vmatpush1.msra.mxu0 %v33
    %57 = vmatprep.subr.mxu0 0.0
    %58 = vmatpush1.msra.mxu0 %v34
    %59 = vmatprep.subr.mxu0 0.0
    %60 = vmatpush1.msra.mxu0 %v35
    %61 = vmatprep.subr.mxu0 0.0
    %62 = vmatpush1.msra.mxu0 %v36
    %63 = vmatprep.subr.mxu0 0.0
    %64 = vmatpush1.msra.mxu0 %v37
    %65 = vmatprep.subr.mxu0 0.0
    %66 = vmatpush1.msra.mxu0 %v38
    %67 = vmatprep.subr.mxu0 0.0
    %68 = vmatpush1.msra.mxu0 %v39
    %69 = vmatprep.subr.mxu0 0.0
    %70 = vmatpush1.msra.mxu0 %v40
    %71 = vmatprep.subr.mxu0 0.0
    %72 = vmatpush1.msra.mxu0 %v41
    %73 = vmatprep.subr.mxu0 0.0
    %74 = vmatpush1.msra.mxu0 %v42
    %75 = vmatprep.subr.mxu0 0.0
    %76 = vmatpush1.msra.mxu0 %v43
    %77 = vmatprep.subr.mxu0 0.0
    %78 = vmatpush1.msra.mxu0 %v44
    %79 = vmatprep.subr.mxu0 0.0
    %80 = vmatpush1.msra.mxu0 %v45
    %81 = vmatprep.subr.mxu0 0.0
    %82 = vmatpush1.msra.mxu0 %v46
    %83 = vmatprep.subr.mxu0 0.0
    %84 = vmatpush1.msra.mxu0 %v47
    %85 = vmatprep.subr.mxu0 0.0
    %86 = vmatpush1.msra.mxu0 0.0
    %87 = vmatprep.subr.mxu0 0.0
    %88 = vmatpush1.msra.mxu0 0.0
    %89 = vmatprep.subr.mxu0 0.0
    %90 = vmatpush1.msra.mxu0 0.0
    %91 = vmatprep.subr.mxu0 0.0
    %92 = vmatpush1.msra.mxu0 0.0
    %93 = vmatprep.subr.mxu0 0.0
    %94 = vmatpush1.msra.mxu0 0.0
    %95 = vmatprep.subr.mxu0 0.0
    %96 = vmatpush1.msra.mxu0 0.0
    %97 = vmatprep.subr.mxu0 0.0
    %98 = vmatpush1.msra.mxu0 0.0
    %99 = vmatprep.subr.mxu0 0.0
    %100 = vmatpush1.msra.mxu0 0.0
    %101 = vmatprep.subr.mxu0 0.0
    %102 = vmatpush1.msra.mxu0 0.0
    %103 = vmatprep.subr.mxu0 0.0
    %104 = vmatpush1.msra.mxu0 0.0
    %105 = vmatprep.subr.mxu0 0.0
    %106 = vmatpush1.msra.mxu0 0.0
    %107 = vmatprep.subr.mxu0 0.0
    %108 = vmatpush1.msra.mxu0 0.0
    %109 = vmatprep.subr.mxu0 0.0
    %110 = vmatpush1.msra.mxu0 0.0
    %111 = vmatprep.subr.mxu0 0.0
    %112 = vmatpush1.msra.mxu0 0.0
    %113 = vmatprep.subr.mxu0 0.0
    %114 = vmatpush1.msra.mxu0 0.0
    %115 = vmatprep.subr.mxu0 0.0
    %116 = vmatpush1.msra.mxu0 0.0
    %117 = vmatprep.mubr.f32.mxu0 0.0
    %118 = vmatmul.mubr.f32.gmra.mrb[0].mxu0 %v51
    %v119 = vpop.f32.mrb[0].mxu0
    %v120 = vadd.f32 0.0, %v119
    %v121 = vpop.f32.mrb[0].mxu0
    %122 = vdwg.mxu0
    %v123 = vmax.f32 %v120, 0.0
    %v124 = vld [vmem:[%s2] sm:$0x3]
    %vm125 = vcmask 15360
    %v127 = vsel %vm125, %v123, 0
    %v130 = vsel %vm17, %v124, 0
    %132 = vmatprep.subr.mxu0 0.0
    %133 = vmatpush1.msra.mxu0 %v130
    %134 = vmatprep.subr.mxu0 0.0
    %135 = vmatpush1.msra.mxu0 0.0
    %136 = vmatprep.subr.mxu0 0.0
    %137 = vmatpush1.msra.mxu0 0.0
    %138 = vmatprep.subr.mxu0 0.0
    %139 = vmatpush1.msra.mxu0 0.0
    %140 = vmatprep.subr.mxu0 0.0
    %141 = vmatpush1.msra.mxu0 0.0
    %142 = vmatprep.subr.mxu0 0.0
    %143 = vmatpush1.msra.mxu0 0.0
    %144 = vmatprep.subr.mxu0 0.0
    %145 = vmatpush1.msra.mxu0 0.0
    %146 = vmatprep.subr.mxu0 0.0
    %147 = vmatpush1.msra.mxu0 0.0
    %148 = vmatprep.subr.mxu0 0.0
    %149 = vmatpush1.msra.mxu0 0.0
    %150 = vmatprep.subr.mxu0 0.0
    %151 = vmatpush1.msra.mxu0 0.0
    %152 = vmatprep.subr.mxu0 0.0
    %153 = vmatpush1.msra.mxu0 0.0
    %154 = vmatprep.subr.mxu0 0.0
    %155 = vmatpush1.msra.mxu0 0.0
    %156 = vmatprep.subr.mxu0 0.0
    %157 = vmatpush1.msra.mxu0 0.0
    %158 = vmatprep.subr.mxu0 0.0
    %159 = vmatpush1.msra.mxu0 0.0
    %160 = vmatprep.subr.mxu0 0.0
    %161 = vmatpush1.msra.mxu0 0.0
    %162 = vmatprep.subr.mxu0 0.0
    %163 = vmatpush1.msra.mxu0 0.0
    %164 = vmatprep.subr.mxu0 0.0
    %165 = vmatpush1.msra.mxu0 0.0
    %166 = vmatprep.subr.mxu0 0.0
    %167 = vmatpush1.msra.mxu0 0.0
    %168 = vmatprep.subr.mxu0 0.0
    %169 = vmatpush1.msra.mxu0 0.0
    %170 = vmatprep.subr.mxu0 0.0
    %171 = vmatpush1.msra.mxu0 0.0
    %172 = vmatprep.subr.mxu0 0.0
    %173 = vmatpush1.msra.mxu0 0.0
    %174 = vmatprep.subr.mxu0 0.0
    %175 = vmatpush1.msra.mxu0 0.0
    %176 = vmatprep.subr.mxu0 0.0
    %177 = vmatpush1.msra.mxu0 0.0
    %178 = vmatprep.subr.mxu0 0.0
    %179 = vmatpush1.msra.mxu0 0.0
    %180 = vmatprep.subr.mxu0 0.0
    %181 = vmatpush1.msra.mxu0 0.0
    %182 = vmatprep.subr.mxu0 0.0
    %183 = vmatpush1.msra.mxu0 0.0
    %184 = vmatprep.subr.mxu0 0.0
    %185 = vmatpush1.msra.mxu0 0.0
    %186 = vmatprep.subr.mxu0 0.0
    %187 = vmatpush1.msra.mxu0 0.0
    %188 = vmatprep.subr.mxu0 0.0
    %189 = vmatpush1.msra.mxu0 0.0
    %190 = vmatprep.subr.mxu0 0.0
    %191 = vmatpush1.msra.mxu0 0.0
    %192 = vmatprep.subr.mxu0 0.0
    %193 = vmatpush1.msra.mxu0 0.0
    %194 = vmatprep.subr.mxu0 0.0
    %195 = vmatpush1.msra.mxu0 0.0
    %196 = vmatprep.mubr.f32.mxu0 0.0
    %197 = vmatmul.mubr.f32.gmra.mrb[0].mxu0 %v127
    %v198 = vpop.f32.mrb[0].mxu0
    %v199 = vadd.f32 0.0, %v198
    %v200 = vpop.f32.mrb[0].mxu0
    %201 = vdwg.mxu0
    %v202 = vxor.u32 %v199, 2147483648
    %v203 = vmul.f32 %v202, 1.442695
    %v204 = vpow.pop %v203
    %v205 = vadd.f32 %v204, 1.0
    %v206 = vrcp.pop %v205
    %v207 = vmul.f32 1.0, %v206
    %v210 = vunpack.c.l.s4 1966171168
    %v211 = vunpack.c.0.s8 %v210
    %v212 = vlaneseq
    %v213 = vshrl.u32 %v212, 7
    %v214 = vsub.s32 %v211, %v213
    %v215 = vrot.slane %v207, %v214
    %v216 = vcombine.high %v215, %v215
    %v218 = vunpack.c.l.s4 1966171168
    %v219 = vunpack.c.0.s8 %v218
    %v220 = vlaneseq
    %v221 = vshrl.u32 %v220, 7
    %v222 = vsub.s32 %v219, %v221
    %v223 = vrot.slane %v215, %v222
    %v225 = vunpack.c.l.s4 1966171168
    %v226 = vunpack.c.0.s8 %v225
    %v227 = vlaneseq
    %v228 = vshrl.u32 %v227, 7
    %v229 = vsub.s32 %v226, %v228
    %v230 = vrot.slane %v216, %v229
    %v231 = vlaneseq
    %v232 = vshrl.u32 %v231, 7
    %v233 = vsub.s32 0, %v232
    %v234 = vrot.slane %v223, %v233
    %v235 = vlaneseq
    %v236 = vshrl.u32 %v235, 7
    %v237 = vsub.s32 0, %v236
    %v238 = vrot.slane %v230, %v237
    %v241 = vmul.f32 %v15, %v234
    %v242 = vmul.f32 %v16, %v238
    %243 = vst [vmem:[#allocation2] sm:$0x3] %v241
    %244 = vst [vmem:[#allocation2 + $0x2] sm:$0x3] %v242
    // Predicated region
    $region14: #{tpu_custom_call.1} parent=1 // pred_check
      _
    $region15: #{tpu_custom_call.1} parent=1 // pred_check_branch
      %246 = sbr.rel (0) target = $region17
    $region16: #{tpu_custom_call.1} parent=1 // pred_region
      %s248 = ssub.s32 64, 64
      %249 = vsyncadd [#allocation3], %s248
      %s250 = sshll.u32 [#allocation2], 4
      %s251 = int_to_ptr.vmem [resolvable:$true] %s250
      %256 = dma.vmem_to_hbm [thread:$0]  %s251, 64, %s3, [#allocation3], 32, 32, 2
    $region17: #{tpu_custom_call.1} parent=1 // pred_fallthru
      _
    // Predicated region
    $region18: #{tpu_custom_call.1} parent=1 // pred_check
      _
    $region19: #{tpu_custom_call.1} parent=1 // pred_check_branch
      %258 = sbr.rel (0) target = $region21
    $region20: #{tpu_custom_call.1} parent=1 // pred_region
      %259 = dma.done [#allocation3], 64
    $region21: #{tpu_custom_call.1} parent=1 // pred_fallthru
      _
    %260 = vsyncpa [#allocation3], 1

</llo_original>
